<compile_context>
chip_gen: v7x
topology: tpu7x:2x2x1
jax: 0.10.0
libtpu: 0.0.40
codegen_flags: <defaults>
</compile_context>

<pallas_src>
import functools
import math

import jax
import jax.numpy as jnp
from jax import lax
from jax.experimental import pallas as pl
from jax.experimental.pallas import tpu as pltpu

# ---------------------------------------------------------------------------
# deterministic parameter initialization
# ---------------------------------------------------------------------------
_PARAM_KEY = [jax.random.PRNGKey(42)]
# explicit scoped-VMEM budget: largest double-buffered blocks are a few MiB,
# well within v7x's 64 MiB physical VMEM and v5e/v6e scoped limits.
_VMEM_LIMIT = 32 * 1024 * 1024


def _next_key():
    _PARAM_KEY[0], sub = jax.random.split(_PARAM_KEY[0])
    return sub


# ---------------------------------------------------------------------------
# Pallas kernels
# ---------------------------------------------------------------------------
def _matmul_bias_act_kernel(w_ref, col_ref, bias_ref, o_ref, *, act):
    # w: [N, K] bf16 ; col block: [K, TM] bf16 ; bias: [N, 1] f32
    acc = jnp.dot(w_ref[...], col_ref[...], preferred_element_type=jnp.float32)
    acc = acc + bias_ref[...]
    if act:                                   # SiLU on the f32 accumulator
        acc = acc * jax.nn.sigmoid(acc)
    o_ref[...] = acc.astype(o_ref.dtype)      # lane-dense store (bf16 by default)


def _choose_m_tile(m):
    """Small M -> one full-dim block; else pad M to a 128 multiple and pick the
    largest tile in {512, 256, 128} dividing it (512 fits v7x VMEM comfortably
    and feeds the 256-wide MXU on v6e/v7x)."""
    if m <= 512:
        return m, m
    mp = ((m + 127) // 128) * 128
    for t in (512, 256, 128):
        if mp % t == 0:
            return t, mp
    return mp, mp                              # unreachable: mp % 128 == 0


def matmul_bias_act(col, w, bias, act, out_dtype=jnp.bfloat16):
    """col [K, M] with w [N, K] (+bias[N], +SiLU) -> [N, M].

    M = B*H*W sits on the lane axis (unmasked 128-multiple stores), grid over
    M-tiles only.  bf16 MXU operands, f32 accumulation, bf16 output by default.
    """
    K, M = col.shape
    N = w.shape[0]
    TM, Mp = _choose_m_tile(M)
    if Mp != M:
        col = jnp.pad(col, ((0, 0), (0, Mp - M)))
    bias2 = bias.reshape(N, 1).astype(jnp.float32)
    out = pl.pallas_call(
        functools.partial(_matmul_bias_act_kernel, act=act),
        out_shape=jax.ShapeDtypeStruct((N, Mp), out_dtype),
        grid=(Mp // TM,),
        in_specs=[
            pl.BlockSpec((N, K), lambda m: (0, 0)),
            pl.BlockSpec((K, TM), lambda m: (0, m)),
            pl.BlockSpec((N, 1), lambda m: (0, 0)),
        ],
        out_specs=pl.BlockSpec((N, TM), lambda m: (0, m)),
        compiler_params=pltpu.CompilerParams(
            dimension_semantics=("parallel",),
            vmem_limit_bytes=_VMEM_LIMIT),
    )(w.astype(jnp.bfloat16), col.astype(jnp.bfloat16), bias2)
    if Mp != M:
        out = out[:, :M]
    return out


def _attention_kernel(q_ref, k_ref, v_ref, o_ref):
    # scale is folded into the q projection weights at construction time.
    q = q_ref[0]                                  # [Ck, L] bf16
    k = k_ref[0]                                  # [Ck, L] bf16
    v = v_ref[0]                                  # [Cv, L] bf16
    # TODO(synk): verify via pl.lower_as_mlir that these contraction layouts do
    # not emit XLU transposes; they lowered cleanly in practice.
    s = lax.dot_general(q, k, (((0,), (0,)), ((), ())),
                        preferred_element_type=jnp.float32)        # [L, L]
    s = s - jnp.max(s, axis=-1, keepdims=True)
    p = jnp.exp(s)
    p = p * pl.reciprocal(jnp.sum(p, axis=-1, keepdims=True), approx=True)
    o = lax.dot_general(v, p.astype(jnp.bfloat16), (((1,), (1,)), ((), ())),
                        preferred_element_type=jnp.float32)        # [Cv, L]
    o_ref[0] = o.astype(o_ref.dtype)


def attention_core(q, k, v):
    """q,k: [B, Ck, L]; v: [B, Cv, L] -> out [B, Cv, L] bf16 (bmm-softmax-bmm)."""
    Bq, Ck, L = q.shape
    Cv = v.shape[1]
    return pl.pallas_call(
        _attention_kernel,
        out_shape=jax.ShapeDtypeStruct((Bq, Cv, L), jnp.bfloat16),
        grid=(Bq,),
        in_specs=[
            pl.BlockSpec((1, Ck, L), lambda b: (b, 0, 0)),
            pl.BlockSpec((1, Ck, L), lambda b: (b, 0, 0)),
            pl.BlockSpec((1, Cv, L), lambda b: (b, 0, 0)),
        ],
        out_specs=pl.BlockSpec((1, Cv, L), lambda b: (b, 0, 0)),
        compiler_params=pltpu.CompilerParams(
            dimension_semantics=("parallel",), vmem_limit_bytes=_VMEM_LIMIT),
    )(q.astype(jnp.bfloat16), k.astype(jnp.bfloat16), v.astype(jnp.bfloat16))


def _depth_fuse_kernel(feat_ref, depth_ref, o_ref):
    f = feat_ref[...].astype(jnp.float32)              # [C, TL]
    d = depth_ref[...].astype(jnp.float32)             # [D, TL]
    d = d - jnp.max(d, axis=0, keepdims=True)
    e = jnp.exp(d)
    sm = e * pl.reciprocal(jnp.sum(e, axis=0, keepdims=True), approx=True)
    o_ref[...] = (sm[:, None, :] * f[None, :, :]).astype(o_ref.dtype)   # [D, C, TL]


def depth_fuse(feat, depth_logits):
    """feat [C, M] x softmax_D(depth [D, M]) -> [D, C, M] bf16 (M = BN*h*w lanes)."""
    C, M = feat.shape
    D = depth_logits.shape[0]
    TL, Mp = _choose_m_tile(M)
    if Mp != M:
        feat = jnp.pad(feat, ((0, 0), (0, Mp - M)))
        depth_logits = jnp.pad(depth_logits, ((0, 0), (0, Mp - M)))
    out = pl.pallas_call(
        _depth_fuse_kernel,
        out_shape=jax.ShapeDtypeStruct((D, C, Mp), jnp.bfloat16),
        grid=(Mp // TL,),
        in_specs=[
            pl.BlockSpec((C, TL), lambda m: (0, m)),
            pl.BlockSpec((D, TL), lambda m: (0, m)),
        ],
        out_specs=pl.BlockSpec((D, C, TL), lambda m: (0, 0, m)),
        compiler_params=pltpu.CompilerParams(
            dimension_semantics=("parallel",), vmem_limit_bytes=_VMEM_LIMIT),
    )(feat.astype(jnp.bfloat16), depth_logits.astype(jnp.bfloat16))
    if Mp != M:
        out = out[:, :, :M]
    return out


# ---------------------------------------------------------------------------
# conv via im2col (CBHW layout, batch folded into lanes) + Pallas matmul
# ---------------------------------------------------------------------------
def _im2col_cbhw(x, k, stride, pad):
    """x [C, B, H, W] -> col [C*k*k, B*Ho*Wo] (K order matches torch weights)."""
    C, B, H, W = x.shape
    if pad:
        x = jnp.pad(x, ((0, 0), (0, 0), (pad, pad), (pad, pad)))
    Ho = (H + 2 * pad - k) // stride + 1
    Wo = (W + 2 * pad - k) // stride + 1
    if k == 1 and stride == 1:
        return x.reshape(C, B * Ho * Wo), Ho, Wo
    cols = []
    for i in range(k):
        for j in range(k):
            cols.append(x[:, :, i:i + stride * Ho:stride, j:j + stride * Wo:stride])
    col = jnp.stack(cols, axis=1).reshape(C * k * k, B * Ho * Wo)
    return col, Ho, Wo


def conv2d_pallas(x, w, bias, k, stride, pad, act, out_dtype=jnp.bfloat16):
    """x [Cin,B,H,W]; w bf16 [Cout, Cin*k*k]; bias f32 [Cout] -> [Cout,B,Ho,Wo]."""
    Cout = w.shape[0]
    B = x.shape[1]
    col, Ho, Wo = _im2col_cbhw(x.astype(jnp.bfloat16), k, stride, pad)
    out = matmul_bias_act(col, w, bias, act, out_dtype)    # [Cout, B*Ho*Wo]
    return out.reshape(Cout, B, Ho, Wo)


# ---------------------------------------------------------------------------
# network blocks (ultralytics-style, BN folded at construction time)
# ---------------------------------------------------------------------------
class PConv:
    """Conv2d(no bias) + BatchNorm(eval, folded) + SiLU; weights stored bf16."""

    def __init__(self, c1, c2, k=1, s=1, p=None, act=True):
        self.k, self.s = k, s
        self.p = (k // 2) if p is None else p
        self.act = act
        std = 0.5 / math.sqrt(c1 * k * k)
        w = std * jax.random.normal(_next_key(), (c2, c1, k, k), jnp.float32)
        scale = 1.0 + 0.05 * jax.random.normal(_next_key(), (c2,), jnp.float32)
        shift = 0.02 * jax.random.normal(_next_key(), (c2,), jnp.float32)
        self.w = (w * scale[:, None, None, None]).reshape(c2, c1 * k * k).astype(jnp.bfloat16)
        self.bias = shift

    def __call__(self, x):
        return conv2d_pallas(x, self.w, self.bias, self.k, self.s, self.p, self.act)


class PConv2d:
    """Plain nn.Conv2d 1x1 (with bias), no activation (attention q/k/v).
    w_scale lets the attention scale be folded into the projection."""

    def __init__(self, c1, c2, k=1, w_scale=1.0):
        self.k = k
        std = 0.5 / math.sqrt(c1 * k * k)
        w = std * jax.random.normal(_next_key(), (c2, c1, k, k), jnp.float32)
        b = 0.02 * jax.random.normal(_next_key(), (c2,), jnp.float32)
        self.w = (w_scale * w).reshape(c2, c1 * k * k).astype(jnp.bfloat16)
        self.bias = w_scale * b

    def __call__(self, x):
        return conv2d_pallas(x, self.w, self.bias, self.k, 1, 0, act=False)


class PHeads:
    """cls/reg/iou 1x1 heads fused into one Pallas matmul (N = nc + 9 + 1), f32 out."""

    def __init__(self, c1, num_classes):
        self.nc = num_classes
        std = 0.5 / math.sqrt(c1)
        ws, bs = [], []
        for cout in (num_classes, 9, 1):
            ws.append(std * jax.random.normal(_next_key(), (cout, c1), jnp.float32))
            bs.append(0.02 * jax.random.normal(_next_key(), (cout,), jnp.float32))
        self.w = jnp.concatenate(ws, axis=0).astype(jnp.bfloat16)
        self.b = jnp.concatenate(bs, axis=0)

    def __call__(self, x):                       # x: [C, B, H, W]
        C, B, H, W = x.shape
        col = x.astype(jnp.bfloat16).reshape(C, B * H * W)
        out = matmul_bias_act(col, self.w, self.b, act=False, out_dtype=jnp.float32)
        out = out.reshape(-1, B, H, W).transpose(1, 0, 2, 3)       # [B, nc+10, H, W]
        nc = self.nc
        return out[:, :nc], out[:, nc:nc + 9], out[:, nc + 9:nc + 10]


class PBottleneck:
    def __init__(self, c1, c2, shortcut=True, e=0.5):
        c_ = int(c2 * e)
        self.cv1 = PConv(c1, c_, 3, 1)
        self.cv2 = PConv(c_, c2, 3, 1)
        self.add = shortcut and c1 == c2

    def __call__(self, x):
        y = self.cv2(self.cv1(x))
        return x + y if self.add else y


class PC2f:
    def __init__(self, c1, c2, n=1, shortcut=False, e=0.5):
        self.c = int(c2 * e)
        self.cv1 = PConv(c1, 2 * self.c, 1, 1)
        self.cv2 = PConv((2 + n) * self.c, c2, 1)
        self.m = [PBottleneck(self.c, self.c, shortcut, e=1.0) for _ in range(n)]

    def __call__(self, x):                        # channels on axis 0
        y = self.cv1(x)
        ys = [y[:self.c], y[self.c:]]
        for m in self.m:
            ys.append(m(ys[-1]))
        return self.cv2(jnp.concatenate(ys, axis=0))


def maxpool2d(x, k):
    pad = k // 2
    return lax.reduce_window(x, jnp.array(-jnp.inf, dtype=x.dtype), lax.max,
                             (1, 1, k, k), (1, 1, 1, 1),
                             ((0, 0), (0, 0), (pad, pad), (pad, pad)))


class PSPPF:
    def __init__(self, c1, c2, k=5):
        c_ = c1 // 2
        self.cv1 = PConv(c1, c_, 1, 1)
        self.cv2 = PConv(c_ * 4, c2, 1, 1)
        self.k = k

    def __call__(self, x):
        x = self.cv1(x)
        y1 = maxpool2d(x, self.k)
        y2 = maxpool2d(y1, self.k)
        y3 = maxpool2d(y2, self.k)
        return self.cv2(jnp.concatenate([x, y1, y2, y3], axis=0))


class PDWConv:
    """Depthwise 3x3 conv + folded BN, no act (tiny positional-encoding conv)."""

    def __init__(self, c, k=3):
        std = 0.5 / math.sqrt(k * k)
        self.w = std * jax.random.normal(_next_key(), (c, k, k), jnp.float32)
        self.scale = 1.0 + 0.05 * jax.random.normal(_next_key(), (c,), jnp.float32)
        self.shift = 0.02 * jax.random.normal(_next_key(), (c,), jnp.float32)
        self.k = k

    def __call__(self, x):                        # x: [C, B, H, W]
        C, B, H, W = x.shape
        pad = self.k // 2
        xp = jnp.pad(x, ((0, 0), (0, 0), (pad, pad), (pad, pad)))
        w = self.w * self.scale[:, None, None]
        acc = jnp.zeros((C, B, H, W), jnp.float32)
        for i in range(self.k):
            for j in range(self.k):
                acc = acc + xp[:, :, i:i + H, j:j + W].astype(jnp.float32) \
                      * w[:, i, j][:, None, None, None]
        return (acc + self.shift[:, None, None, None]).astype(x.dtype)


class PAttentionBlock:
    """PSA internal attention (num_heads clamped to >= 1 for small dims)."""

    def __init__(self, dim, num_heads, attn_ratio=0.5):
        self.num_heads = num_heads
        self.head_dim = dim // num_heads
        self.key_dim = int(self.head_dim * attn_ratio)
        self.scale = self.key_dim ** (-0.5)
        h = dim + self.key_dim * num_heads * 2
        self.qkv = PConv(dim, h, 1, act=False)
        self.proj = PConv(dim, dim, 1, act=False)
        self.pe = PDWConv(dim, 3)
        # Fold the attention scale into the q rows of the fused qkv projection.
        step = 2 * self.key_dim + self.head_dim
        row_scale = jnp.where(jnp.arange(h) % step < self.key_dim, self.scale, 1.0)
        self.qkv.w = (self.qkv.w.astype(jnp.float32)
                      * row_scale[:, None]).astype(jnp.bfloat16)
        self.qkv.bias = self.qkv.bias * row_scale

    def __call__(self, x):                        # x: [C, B, H, W], C == dim
        C, B, H, W = x.shape
        L = H * W
        nh, kd, hd = self.num_heads, self.key_dim, self.head_dim
        qkv = self.qkv(x).reshape(nh, 2 * kd + hd, B, L)
        q = qkv[:, :kd].transpose(0, 2, 1, 3).reshape(nh * B, kd, L)
        k = qkv[:, kd:2 * kd].transpose(0, 2, 1, 3).reshape(nh * B, kd, L)
        v = qkv[:, 2 * kd:].transpose(0, 2, 1, 3).reshape(nh * B, hd, L)
        o = attention_core(q, k, v).reshape(nh, B, hd, L)
        o = o.transpose(0, 2, 1, 3).reshape(C, B, H, W)
        v_sp = v.reshape(nh, B, hd, L).transpose(0, 2, 1, 3).reshape(C, B, H, W)
        o = o + self.pe(v_sp)
        return self.proj(o)


class PPSA:
    def __init__(self, c1, c2, e=0.5):
        assert c1 == c2
        self.c = int(c1 * e)
        self.cv1 = PConv(c1, 2 * self.c, 1)
        self.cv2 = PConv(2 * self.c, c1, 1)
        self.attn = PAttentionBlock(self.c, num_heads=max(1, self.c // 64), attn_ratio=0.5)
        self.ffn1 = PConv(self.c, self.c * 2, 1)
        self.ffn2 = PConv(self.c * 2, self.c, 1, act=False)

    def __call__(self, x):                        # [C1, B, H, W]
        y = self.cv1(x)
        a, b = y[:self.c], y[self.c:]
        b = b + self.attn(b)
        b = b + self.ffn2(self.ffn1(b))
        return self.cv2(jnp.concatenate([a, b], axis=0))


class PCrossAttention:
    """Exact port of CrossAttention: 1x1 q/k/v convs + bmm/softmax/bmm (Pallas).
    The attention scale is folded into the q projection weights."""

    def __init__(self, dim):
        scale = dim ** (-0.5)
        self.q = PConv2d(dim, dim, 1, w_scale=scale)
        self.k = PConv2d(dim, dim, 1)
        self.v = PConv2d(dim, dim, 1)

    def __call__(self, x1, x2):                   # [C, B, X, Y]
        C, B, X, Y = x1.shape
        L = X * Y
        q = self.q(x1).reshape(C, B, L).transpose(1, 0, 2)
        k = self.k(x2).reshape(C, B, L).transpose(1, 0, 2)
        v = self.v(x2).reshape(C, B, L).transpose(1, 0, 2)
        out = attention_core(q, k, v)                       # [B, C, L] bf16
        return out.transpose(1, 0, 2).reshape(C, B, X, Y)


# ---------------------------------------------------------------------------
# LSS geometry helpers (glue)
# ---------------------------------------------------------------------------
def gen_dx_bx(xbound, ybound, zbound):
    rows = (xbound, ybound, zbound)
    dx = jnp.array([r[2] for r in rows], jnp.float32)
    bx = jnp.array([r[0] + r[2] / 2.0 for r in rows], jnp.float32)
    nx = [int((r[1] - r[0]) / r[2]) for r in rows]
    return dx, bx, nx


def bilinear_resize_align_corners(x, out_h, out_w):
    C, B, H, W = x.shape
    if (H, W) == (out_h, out_w):
        return x
    ys = jnp.linspace(0.0, H - 1.0, out_h)
    xs = jnp.linspace(0.0, W - 1.0, out_w)
    y0 = jnp.clip(jnp.floor(ys).astype(jnp.int32), 0, H - 1)
    x0 = jnp.clip(jnp.floor(xs).astype(jnp.int32), 0, W - 1)
    y1 = jnp.clip(y0 + 1, 0, H - 1)
    x1 = jnp.clip(x0 + 1, 0, W - 1)
    wy = (ys - y0.astype(jnp.float32))[None, None, :, None]
    wx = (xs - x0.astype(jnp.float32))[None, None, None, :]
    xf = x.astype(jnp.float32)
    v00 = xf[:, :, y0][:, :, :, x0]
    v01 = xf[:, :, y0][:, :, :, x1]
    v10 = xf[:, :, y1][:, :, :, x0]
    v11 = xf[:, :, y1][:, :, :, x1]
    top = v00 * (1.0 - wx) + v01 * wx
    bot = v10 * (1.0 - wx) + v11 * wx
    return (top * (1.0 - wy) + bot * wy).astype(x.dtype)


# ---------------------------------------------------------------------------
# MultiModalBEVENet
# ---------------------------------------------------------------------------
class MultiModalBEVENetPallas:
    def __init__(self, grid_conf, data_aug_conf, outC, num_classes=10,
                 lidar_channels=62, model_type='fusion', use_enhanced_fusion=True):
        # lidar_channels / model_type / use_enhanced_fusion unused in forward (as in reference)
        self.grid_conf = grid_conf
        self.data_aug_conf = data_aug_conf
        self.outC = outC
        self.num_classes = max(1, num_classes)
        self.dx, self.bx, self.nx = gen_dx_bx(grid_conf['xbound'], grid_conf['ybound'],
                                              grid_conf['zbound'])
        self.downsample = 16
        self.camC = 64
        self.frustum = self._create_frustum()
        self.D = int(self.frustum.shape[0])

        self.cam_backbone = [
            PConv(3, 32, k=7, s=2, p=3), PConv(32, 64, k=3, s=2, p=1),
            PC2f(64, 64, n=1), PConv(64, 128, k=3, s=2, p=1),
            PC2f(128, 128, n=2), PConv(128, self.camC, k=3, s=2, p=1)]
        self.depth_net = [PConv(self.camC, self.camC, k=3, s=1, p=1),
                          PConv(self.camC, self.D, k=1, s=1, p=0)]
        self.lidar_encoder = [PConv(18, 32, k=3, s=1, p=1), PConv(32, 64, k=3, s=2, p=1),
                              PC2f(64, 64, n=1), PSPPF(64, self.camC),
                              PPSA(self.camC, self.camC)]
        self.cross_attn_cam2lidar = PCrossAttention(self.camC)
        self.cross_attn_lidar2cam = PCrossAttention(self.camC)
        fusion_channels = 2 * self.camC
        self.fusion_net = PConv(fusion_channels, fusion_channels, k=1)
        self.bev_head = [PConv(fusion_channels, 128, k=1, s=1), PC2f(128, 256, n=2),
                         PSPPF(256, 256), PConv(256, 384, k=1, s=1)]
        self.heads = PHeads(384, self.num_classes)      # fused cls/reg/iou 1x1 heads

    def _create_frustum(self):
        ogfH, ogfW = self.data_aug_conf['final_dim']
        fH, fW = ogfH // self.downsample, ogfW // self.downsample
        ds = jnp.arange(*self.grid_conf['dbound'], dtype=jnp.float32)
        D = ds.shape[0]
        ds = jnp.broadcast_to(ds[:, None, None], (D, fH, fW))
        xs = jnp.broadcast_to(jnp.linspace(0.0, ogfW - 1.0, fW)[None, None, :], (D, fH, fW))
        ys = jnp.broadcast_to(jnp.linspace(0.0, ogfH - 1.0, fH)[None, :, None], (D, fH, fW))
        return jnp.stack([xs, ys, ds], axis=-1).astype(jnp.float32)

    def get_geometry(self, rots, trans, intrins, post_rots, post_trans):
        # TODO(synk): proj_matrix_cache (Python-side memoization) omitted; recomputed each call.
        B, N = trans.shape[:2]
        intrins_inv = jnp.linalg.inv(intrins)
        cam_to_ego = jnp.matmul(rots, intrins_inv)
        post_rots_inv = jnp.linalg.inv(post_rots)
        D, fH, fW, _ = self.frustum.shape
        points = self.frustum[None, None] - post_trans[:, :, None, None, None, :]
        points = points.reshape(B, N, -1, 3)
        points = jnp.matmul(points, jnp.swapaxes(post_rots_inv, -1, -2))
        points = points.reshape(B, N, D, fH, fW, 3)
        points = jnp.concatenate([points[..., :2] * points[..., 2:3], points[..., 2:3]], -1)
        points = points.reshape(B, N, -1, 3)
        points = jnp.matmul(points, jnp.swapaxes(cam_to_ego, -1, -2))
        points = points + trans[:, :, None, :]
        return points.reshape(B, N, D, fH, fW, 3)

    def get_cam_feats(self, x):
        B, N, C, H, W = x.shape
        x = x.reshape(B * N, C, H, W).transpose(1, 0, 2, 3)   # CBHW: [3, BN, H, W]
        for m in self.cam_backbone:
            x = m(x)
        feat = x                                              # [camC, BN, h, w]
        d = feat
        for m in self.depth_net:
            d = m(d)                                          # [D, BN, h, w]
        Cf, BN, h, w = feat.shape
        fused = depth_fuse(feat.reshape(Cf, BN * h * w),
                           d.reshape(self.D, BN * h * w))     # [D, Cf, BN*h*w] bf16
        fused = fused.reshape(self.D, Cf, B, N, h, w).transpose(2, 3, 0, 4, 5, 1)
        # == torch: (feat.unsqueeze(2)*softmax(depth).unsqueeze(1)).view(B,N,C,D,h,w).permute(0,1,3,4,5,2)
        return fused                                          # [B, N, D, h, w, C]

    def voxel_pooling(self, geom_feats, x):
        B, N, D, H, W, C = x.shape
        Nprime = B * N * D * H * W
        nx0, nx1, nx2 = self.nx
        xf = x.reshape(Nprime, C).astype(jnp.float32)
        g = ((geom_feats - (self.bx - self.dx / 2.0)) / self.dx).astype(jnp.int32)
        g = g.reshape(Nprime, 3)
        batch_ix = jnp.repeat(jnp.arange(B, dtype=jnp.int32), Nprime // B)
        kept = ((g[:, 0] >= 0) & (g[:, 0] < nx0) & (g[:, 1] >= 0) & (g[:, 1] < nx1)
                & (g[:, 2] >= 0) & (g[:, 2] < nx2))
        xk = jnp.where(kept[:, None], xf, 0.0)
        gx = jnp.clip(g[:, 0], 0, nx0 - 1)
        gy = jnp.clip(g[:, 1], 0, nx1 - 1)
        gz = jnp.clip(g[:, 2], 0, nx2 - 1)
        # TODO(synk): the sort + cumsum_trick dedup is replaced by an equivalent
        # scatter-add (identical per-voxel sums); this data-dependent scatter stays in JAX.
        final = jnp.zeros((B, nx2, nx0, nx1, C), jnp.float32)
        final = final.at[batch_ix, gz, gx, gy].add(xk)
        # == torch.cat(final[B,C,nx2,X,Y].unbind(dim=2), 1): channel order is (z, c) z-major
        final = final.transpose(0, 1, 4, 2, 3).reshape(B, nx2 * C, nx0, nx1)
        return final

    def get_voxels(self, cam_imgs, rots, trans, intrins, post_rots, post_trans, lidar_bev):
        geom = self.get_geometry(rots, trans, intrins, post_rots, post_trans)
        cam_feats = self.get_cam_feats(cam_imgs)
        cam_voxels = self.voxel_pooling(geom, cam_feats)       # [B, nx2*C, X, Y] f32
        lidar_feats = lidar_bev.transpose(1, 0, 2, 3)          # CBHW: [18, B, H, W]
        for m in self.lidar_encoder:
            lidar_feats = m(lidar_feats)                       # [camC, B, h, w] bf16
        if lidar_feats.shape[2:] != cam_voxels.shape[2:]:
            lidar_feats = bilinear_resize_align_corners(
                lidar_feats, cam_voxels.shape[2], cam_voxels.shape[3])
        B = cam_voxels.shape[0]
        # Faithful to the reference .view(B, camC, -1, X, Y).mean(2) (including its
        # (z,c)-vs-(c,z) channel-grouping quirk; exact for nx2 == 1).
        cam_feats_2d = cam_voxels.reshape(
            B, self.camC, -1, cam_voxels.shape[2], cam_voxels.shape[3]).mean(axis=2)
        cam_feats_2d = cam_feats_2d.transpose(1, 0, 2, 3)      # CBHW: [camC, B, X, Y]
        cam_enhanced = self.cross_attn_cam2lidar(cam_feats_2d, lidar_feats)
        lidar_enhanced = self.cross_attn_lidar2cam(lidar_feats, cam_feats_2d)
        fused = jnp.concatenate([cam_enhanced, lidar_enhanced], axis=0)
        fused = self.fusion_net(fused)
        x = fused
        for m in self.bev_head:
            x = m(x)
        return x                                               # [384, B, X, Y]

    def __call__(self, cam_imgs, rots, trans, intrins, post_rots, post_trans, lidar_bev):
        bev_feats = self.get_voxels(cam_imgs, rots, trans, intrins,
                                    post_rots, post_trans, lidar_bev)
        cls_pred, reg_pred, iou_pred = self.heads(bev_feats)
        return {'cls_pred': cls_pred, 'reg_pred': reg_pred, 'iou_pred': iou_pred}


# ---------------------------------------------------------------------------
if __name__ == "__main__":
    grid_conf = {
        'xbound': [-8.0, 8.0, 1.0],
        'ybound': [-8.0, 8.0, 1.0],
        'zbound': [-10.0, 10.0, 20.0],
        'dbound': [4.0, 8.0, 1.0],
    }
    data_aug_conf = {'final_dim': (64, 64)}

    model = MultiModalBEVENetPallas(grid_conf, data_aug_conf, outC=64, num_classes=10)

    key = jax.random.PRNGKey(0)
    k_img, k_lidar = jax.random.split(key)
    B, Ncam = 1, 2
    cam_imgs = jax.random.normal(k_img, (B, Ncam, 3, 64, 64), jnp.float32)
    lidar_bev = jax.random.normal(k_lidar, (B, 18, 16, 16), jnp.float32)
    rots = jnp.broadcast_to(jnp.eye(3, dtype=jnp.float32), (B, Ncam, 3, 3))
    trans = jnp.zeros((B, Ncam, 3), jnp.float32)
    intrins = jnp.broadcast_to(
        jnp.array([[32.0, 0.0, 32.0], [0.0, 32.0, 32.0], [0.0, 0.0, 1.0]], jnp.float32),
        (B, Ncam, 3, 3))
    post_rots = jnp.broadcast_to(jnp.eye(3, dtype=jnp.float32), (B, Ncam, 3, 3))
    post_trans = jnp.zeros((B, Ncam, 3), jnp.float32)

    preds = model(cam_imgs, rots, trans, intrins, post_rots, post_trans, lidar_bev)
    jax.block_until_ready(preds)
    assert preds['cls_pred'].shape == (B, 10, 16, 16)
    assert preds['reg_pred'].shape == (B, 9, 16, 16)
    assert preds['iou_pred'].shape == (B, 1, 16, 16)
    print("KERNEL_OK")
</pallas_src>

<mosaic_0001>
module attributes {stable_mosaic.version = 11 : i64} {
  func.func @_matmul_bias_act_kernel(%arg0: i32, %arg1: memref<32x147xbf16, #tpu.memory_space<vmem>>, %arg2: memref<147x512xbf16, #tpu.memory_space<vmem>>, %arg3: memref<32x1xf32, #tpu.memory_space<vmem>>, %arg4: memref<32x512xbf16, #tpu.memory_space<vmem>>) attributes {dimension_semantics = [#tpu.dimension_semantics<parallel>], iteration_bounds = array<i64: 4>, scalar_prefetch = 0 : i64, scratch_operands = 0 : i64, tpu.core_type = #tpu.core_type<tc>, window_params = [{pipeline_mode = #tpu.pipeline_mode<synchronous>, transform_indices = @transform_0, window_bounds = array<i64: 32, 147>}, {transform_indices = @transform_1, window_bounds = array<i64: 147, 512>}, {pipeline_mode = #tpu.pipeline_mode<synchronous>, transform_indices = @transform_2, window_bounds = array<i64: 32, 1>}, {transform_indices = @transform_3, window_bounds = array<i64: 32, 512>}]} {
    %c0 = arith.constant 0 : index
    %c0_0 = arith.constant 0 : index
    %0 = vector.load %arg1[%c0, %c0_0] : memref<32x147xbf16, #tpu.memory_space<vmem>>, vector<32x147xbf16>
    %c0_1 = arith.constant 0 : index
    %c0_2 = arith.constant 0 : index
    %1 = vector.load %arg2[%c0_1, %c0_2] : memref<147x512xbf16, #tpu.memory_space<vmem>>, vector<147x512xbf16>
    %cst = arith.constant dense<0.000000e+00> : vector<32x512xf32>
    %2 = tpu.matmul %0, %1, %cst {dimension_numbers = #tpu.dot_dimension_numbers<[1], [0], [0], [1], [0, 0, 1, 1], [], []>} : vector<32x147xbf16>, vector<147x512xbf16>, vector<32x512xf32> -> vector<32x512xf32>
    %c0_3 = arith.constant 0 : index
    %c0_4 = arith.constant 0 : index
    %3 = vector.load %arg3[%c0_3, %c0_4] : memref<32x1xf32, #tpu.memory_space<vmem>>, vector<32x1xf32>
    %4 = vector.broadcast %3 : vector<32x1xf32> to vector<32x512xf32>
    %5 = arith.addf %2, %4 : vector<32x512xf32>
    %6 = arith.negf %5 : vector<32x512xf32>
    %7 = math.exp %6 : vector<32x512xf32>
    %cst_5 = arith.constant 1.000000e+00 : f32
    %8 = vector.broadcast %cst_5 : f32 to vector<32x512xf32>
    %9 = arith.addf %8, %7 : vector<32x512xf32>
    %10 = arith.divf %8, %9 : vector<32x512xf32>
    %11 = arith.mulf %5, %10 : vector<32x512xf32>
    %12 = arith.truncf %11 : vector<32x512xf32> to vector<32x512xbf16>
    %c0_6 = arith.constant 0 : index
    %c0_7 = arith.constant 0 : index
    %13 = vector.load %arg4[%c0_6, %c0_7] : memref<32x512xbf16, #tpu.memory_space<vmem>>, vector<32x512xbf16>
    tpu.vector_store %arg4[%c0_6, %c0_7], %12 {strides = array<i32>} : memref<32x512xbf16, #tpu.memory_space<vmem>>, vector<32x512xbf16>,
    return
  }
  func.func @transform_0(%arg0: i32) -> (i32, i32) {
    %c0_i32 = arith.constant 0 : i32
    %c0_i32_0 = arith.constant 0 : i32
    %c0_i32_1 = arith.constant 0 : i32
    return %c0_i32, %c0_i32_0 : i32, i32
  }
  func.func @transform_1(%arg0: i32) -> (i32, i32) {
    %c0_i32 = arith.constant 0 : i32
    %c0_i32_0 = arith.constant 0 : i32
    return %c0_i32, %arg0 : i32, i32
  }
  func.func @transform_2(%arg0: i32) -> (i32, i32) {
    %c0_i32 = arith.constant 0 : i32
    %c0_i32_0 = arith.constant 0 : i32
    %c0_i32_1 = arith.constant 0 : i32
    return %c0_i32, %c0_i32_0 : i32, i32
  }
  func.func @transform_3(%arg0: i32) -> (i32, i32) {
    %c0_i32 = arith.constant 0 : i32
    %c0_i32_0 = arith.constant 0 : i32
    return %c0_i32, %arg0 : i32, i32
  }
}

</mosaic_0001>

<llo_original>
// kernel: tpu_custom_call.1
$region0: #{tpu_custom_call.1}
  #allocation0 [shape = 'u32[]', space=smem, size = 0x4, offset = 0x4, fixed_abs, tag = 'smem constant byte address 0x4 - core index']
  #allocation1 [shape = 'u32[144,128]{1,0:T(1,128)}', space=vmem, size = 0x12000, scoped, tag = 'internal scratch']
  %s0 = inlined_call_operand.vmem [shape: bf16[32,147], index: 0, kind: input, shape index: {}]
  %s1 = inlined_call_operand.hbm [shape: bf16[147,2048], index: 1, kind: input, shape index: {}]
  %s2 = inlined_call_operand.vmem [shape: f32[32,1], index: 2, kind: input, shape index: {}]
  %s3 = inlined_call_operand.hbm [shape: bf16[32,2048], index: 3, kind: output, shape index: {}]
  %s4 = sld [smem:[#allocation0]]
  $region49: #{tpu_custom_call.1} parent=0
    _
  %s6 = ssub.s32 1, %s4
  %s7 = scalar_select 0, %s6, %s4
  $region1: #{tpu_custom_call.1} parent=0
    #allocation2 [shape = 'u8[311296]{0}', space=vmem, size = 0x4c000, scoped, tag = 'input window, operand 1']
    #allocation3 [shape = 's32[2]{0}', space=sflag, size = 0x8, scoped, tag = 'scoped memory for tpu_custom_call.1']
    #allocation4 [shape = 's32[2]{0}', space=sflag, size = 0x8, scoped, tag = 'scoped memory for tpu_custom_call.1']
    #allocation5 [shape = 'u8[65536]{0}', space=vmem, size = 0x10000, scoped, tag = 'output window, operand 0']
    %8 = vsyncpa [#allocation3], 0
    %s9 = scalar_lea.sflag [#allocation3], 1
    %10 = vsyncpa %s9, 0
    %11 = vsyncpa [#allocation4], 0
    %s12 = scalar_lea.sflag [#allocation4], 1
    %13 = vsyncpa %s12, 0
    loop: start=0, step=1, limit=6
    $region2: #{tpu_custom_call.1} parent=1 // loop_pre_header
      _
    $region3: #{tpu_custom_call.1} parent=1 // loop_header
      %s15 = sphi 0, %s19
      %p16 = scmp.ge.s32.totalorder %s15, 6
      %s23 = sphi 0, %s23
      %s25 = sphi 0, %s23
      %s26 = sphi 0, %s25
      %s40 = sphi 0, %s26
      %s46 = sphi 0, %s48
      %s49 = sphi 0, %s46
      %s50 = sphi 0, %s49
      %s66 = sphi 0, %s50
      %s70 = sphi 0, %s70
      %s72 = sphi 0, %s70
      %s73 = sphi 0, %s72
      %s87 = sphi 0, %s73
      %s93 = sphi 0, %s95
      %s96 = sphi 0, %s93
      %s97 = sphi 0, %s96
      %s113 = sphi 0, %s97
    $region4: #{tpu_custom_call.1} parent=1 // loop_header_branch
      %18 = sbr.rel (%p16) target = $region8
    $region5: #{tpu_custom_call.1} parent=1 // loop_body
      %s20 = ssub.s32 %s15, 1
      %s21 = ssub.s32 %s15, 2
      %s22 = sadd.s32 %s15, 1
      %s24 = sadd.s32 %s23, 1
      %p27 = scmp.eq.s32.totalorder %s15, 3
      %p28 = scmp.ne.s32.totalorder %s23, %s25
      %p29 = scmp.eq.s32.totalorder %s15, 0
      %p30 = por %p28, %p29
      %p31 = scmp.ne.s32.totalorder %s23, %s25
      %p32 = scmp.eq.s32.totalorder %s20, 3
      %p33 = por %p31, %p32
      %p34 = scmp.ne.s32.totalorder %s25, %s26
      %p35 = scmp.eq.s32.totalorder %s20, 0
      %p36 = por %p34, %p35
      %p37 = scmp.ne.s32.totalorder %s25, %s26
      %p38 = scmp.eq.s32.totalorder %s21, 3
      %p39 = por %p37, %p38
      %p41 = scmp.ne.s32.totalorder %s26, %s40
      %p42 = scmp.eq.s32.totalorder %s21, 0
      %p43 = por %p41, %p42
      %s44 = ssub.s32 %s15, %s22
      %p45 = scmp.eq.s32.totalorder %s44, 0
      %s47 = sadd.s32 %s46, 1
      %s48 = scalar_select %p45, %s46, %s47
      %p51 = pneg %p45
      %p52 = scmp.eq.s32.totalorder %s15, 3
      %p53 = por %p51, %p52
      %p54 = scmp.ne.s32.totalorder %s46, %s49
      %p55 = scmp.eq.s32.totalorder %s15, 0
      %p56 = por %p54, %p55
      %p57 = scmp.ne.s32.totalorder %s46, %s49
      %p58 = scmp.eq.s32.totalorder %s20, 3
      %p59 = por %p57, %p58
      %p60 = scmp.ne.s32.totalorder %s49, %s50
      %p61 = scmp.eq.s32.totalorder %s20, 0
      %p62 = por %p60, %p61
      %p63 = scmp.ne.s32.totalorder %s49, %s50
      %p64 = scmp.eq.s32.totalorder %s21, 3
      %p65 = por %p63, %p64
      %p67 = scmp.ne.s32.totalorder %s50, %s66
      %p68 = scmp.eq.s32.totalorder %s21, 0
      %p69 = por %p67, %p68
      %s71 = sadd.s32 %s70, 1
      %p74 = scmp.eq.s32.totalorder %s15, 3
      %p75 = scmp.ne.s32.totalorder %s70, %s72
      %p76 = scmp.eq.s32.totalorder %s15, 0
      %p77 = por %p75, %p76
      %p78 = scmp.ne.s32.totalorder %s70, %s72
      %p79 = scmp.eq.s32.totalorder %s20, 3
      %p80 = por %p78, %p79
      %p81 = scmp.ne.s32.totalorder %s72, %s73
      %p82 = scmp.eq.s32.totalorder %s20, 0
      %p83 = por %p81, %p82
      %p84 = scmp.ne.s32.totalorder %s72, %s73
      %p85 = scmp.eq.s32.totalorder %s21, 3
      %p86 = por %p84, %p85
      %p88 = scmp.ne.s32.totalorder %s73, %s87
      %p89 = scmp.eq.s32.totalorder %s21, 0
      %p90 = por %p88, %p89
      %s91 = ssub.s32 %s15, %s22
      %p92 = scmp.eq.s32.totalorder %s91, 0
      %s94 = sadd.s32 %s93, 1
      %s95 = scalar_select %p92, %s93, %s94
      %p98 = pneg %p92
      %p99 = scmp.eq.s32.totalorder %s15, 3
      %p100 = por %p98, %p99
      %p101 = scmp.ne.s32.totalorder %s93, %s96
      %p102 = scmp.eq.s32.totalorder %s15, 0
      %p103 = por %p101, %p102
      %p104 = scmp.ne.s32.totalorder %s93, %s96
      %p105 = scmp.eq.s32.totalorder %s20, 3
      %p106 = por %p104, %p105
      %p107 = scmp.ne.s32.totalorder %s96, %s97
      %p108 = scmp.eq.s32.totalorder %s20, 0
      %p109 = por %p107, %p108
      %p110 = scmp.ne.s32.totalorder %s96, %s97
      %p111 = scmp.eq.s32.totalorder %s21, 3
      %p112 = por %p110, %p111
      %p114 = scmp.ne.s32.totalorder %s97, %s113
      %p115 = scmp.eq.s32.totalorder %s21, 0
      %p116 = por %p114, %p115
      %p117 = scmp.le.s32.totalorder 1, %s15
      %p118 = scmp.lt.s32.totalorder %s15, 5
      %p119 = pnand %p117, %p118
      %p120 = pneg %p119
      // Predicated region
      $region9: #{tpu_custom_call.1} parent=5 // pred_check
        _
      $region10: #{tpu_custom_call.1} parent=5 // pred_check_branch
        %122 = sbr.rel (%p119) target = $region12
      $region11: #{tpu_custom_call.1} parent=5 // pred_region
        %s123 = ssub.s32 %s15, 1
        // Predicated region
        $region13: #{tpu_custom_call.1} parent=11 // pred_check
          %p124 = pneg %p36
        $region14: #{tpu_custom_call.1} parent=11 // pred_check_branch
          %126 = sbr.rel (%p124) target = $region16
        $region15: #{tpu_custom_call.1} parent=11 // pred_region
          _
        $region16: #{tpu_custom_call.1} parent=11 // pred_fallthru
          _
        // Predicated region
        $region17: #{tpu_custom_call.1} parent=11 // pred_check
          %p127 = pneg %p83
        $region18: #{tpu_custom_call.1} parent=11 // pred_check_branch
          %129 = sbr.rel (%p127) target = $region20
        $region19: #{tpu_custom_call.1} parent=11 // pred_region
          _
        $region20: #{tpu_custom_call.1} parent=11 // pred_fallthru
          _
      $region12: #{tpu_custom_call.1} parent=5 // pred_fallthru
        _
      %p130 = scmp.lt.s32.totalorder %s15, 4
      // Predicated region
      $region21: #{tpu_custom_call.1} parent=5 // pred_check
        %p131 = pneg %p130
      $region22: #{tpu_custom_call.1} parent=5 // pred_check_branch
        %133 = sbr.rel (%p131) target = $region24
      $region23: #{tpu_custom_call.1} parent=5 // pred_region
        // Predicated region
        $region25: #{tpu_custom_call.1} parent=23 // pred_check
          %p134 = pneg %p56
        $region26: #{tpu_custom_call.1} parent=23 // pred_check_branch
          %136 = sbr.rel (%p134) target = $region28
        $region27: #{tpu_custom_call.1} parent=23 // pred_region
          %s137 = sand.u32 %s46, 1
          %s138 = scalar_lea.sflag [#allocation3], %s137
          %s139 = sand.u32 %s46, 1
          %s140 = smul.addr %s139, 304
          %s141 = scalar_lea.vmem [#allocation2], %s140
          %s142 = smul.u32 4, %s15
          %s144 = ssub.s32 4864, 4864
          %145 = vsyncadd %s138, %s144
          %s146 = smul.addr %s142, 64
          %s147 = scalar_lea.hbm %s1, %s146
          %s148 = sshll.u32 %s141, 4
          %s149 = int_to_ptr.vmem [resolvable:$true] %s148
          %154 = dma.hbm_to_vmem [thread:$0]  %s147, 4864, %s149, %s138, 1024, 256, 16
        $region28: #{tpu_custom_call.1} parent=23 // pred_fallthru
          _
      $region24: #{tpu_custom_call.1} parent=5 // pred_fallthru
        _
      %p155 = scmp.le.s32.totalorder 1, %s15
      %p156 = scmp.lt.s32.totalorder %s15, 5
      %p157 = pnand %p155, %p156
      %p158 = pneg %p157
      // Predicated region
      $region29: #{tpu_custom_call.1} parent=5 // pred_check
        _
      $region30: #{tpu_custom_call.1} parent=5 // pred_check_branch
        %160 = sbr.rel (%p157) target = $region32
      $region31: #{tpu_custom_call.1} parent=5 // pred_region
        %s161 = ssub.s32 %s15, 1
        %s162 = sand.u32 %s49, 1
        %s163 = scalar_lea.sflag [#allocation3], %s162
        %s164 = sand.u32 %s49, 1
        %s165 = smul.addr %s164, 304
        %s166 = scalar_lea.vmem [#allocation2], %s165
        // Predicated region
        $region33: #{tpu_custom_call.1} parent=31 // pred_check
          %p167 = pneg %p62
        $region34: #{tpu_custom_call.1} parent=31 // pred_check_branch
          %169 = sbr.rel (%p167) target = $region36
        $region35: #{tpu_custom_call.1} parent=31 // pred_region
          %170 = dma.done %s163, 4864
        $region36: #{tpu_custom_call.1} parent=31 // pred_fallthru
          _
        %p171 = pneg %p36
        %p172 = pneg %p33
        %s173 = sand.u32 %s49, 1
        %s174 = scalar_lea.sflag [#allocation3], %s173
        %s175 = sand.u32 %s49, 1
        %s176 = smul.addr %s175, 304
        %s177 = scalar_lea.vmem [#allocation2], %s176
        %p178 = pneg %p62
        %p179 = pneg %p59
        %p180 = pneg %p83
        %p181 = pneg %p80
        %p182 = pneg %p109
        %p183 = pneg %p106
        %s184 = sand.u32 %s96, 1
        %s185 = scalar_lea.sflag [#allocation4], %s184
        %s186 = sand.u32 %s96, 1
        %s187 = smul.addr %s186, 64
        %s188 = scalar_lea.vmem [#allocation5], %s187
        %s189 = smul.u32 4, %s20
        %s190 = smul.u32 4, %s20
        %v192 = vld [vmem:[%s0] sm:$0xff]
        %v193 = vld [vmem:[%s0 + $0x8] sm:$0xff]
        %v194 = vld [vmem:[%s0 + $0x10] sm:$0xff]
        %v195 = vld [vmem:[%s0 + $0x18] sm:$0xff]
        %v196 = vld [vmem:[%s166] sm:$0xff]
        %v197 = vld [vmem:[%s166 + $0x8] sm:$0xff]
        %v198 = vld [vmem:[%s166 + $0x10] sm:$0xff]
        %v199 = vld [vmem:[%s166 + $0x18] sm:$0xff]
        %v200 = vld [vmem:[%s166 + $0x20] sm:$0xff]
        %v201 = vld [vmem:[%s166 + $0x28] sm:$0xff]
        %v202 = vld [vmem:[%s166 + $0x30] sm:$0xff]
        %v203 = vld [vmem:[%s166 + $0x38] sm:$0xff]
        %v204 = vld [vmem:[%s166 + $0x40] sm:$0xff]
        %v205 = vld [vmem:[%s166 + $0x48] sm:$0xff]
        %v206 = vld [vmem:[%s166 + $0x50] sm:$0xff]
        %v207 = vld [vmem:[%s166 + $0x58] sm:$0xff]
        %v208 = vld [vmem:[%s166 + $0x60] sm:$0xff]
        %v209 = vld [vmem:[%s166 + $0x68] sm:$0xff]
        %v210 = vld [vmem:[%s166 + $0x70] sm:$0xff]
        %v211 = vld [vmem:[%s166 + $0x78] sm:$0xff]
        %v212 = vld [vmem:[%s166 + $0x80] sm:$0xff]
        %v213 = vld [vmem:[%s166 + $0x88] sm:$0xff]
        %v214 = vld [vmem:[%s166 + $0x90] sm:$0xff]
        %v215 = vld [vmem:[%s166 + $0x98] sm:$0xff]
        %v216 = vld [vmem:[%s166 + $0xa0] sm:$0xff]
        %v217 = vld [vmem:[%s166 + $0xa8] sm:$0xff]
        %v218 = vld [vmem:[%s166 + $0xb0] sm:$0xff]
        %v219 = vld [vmem:[%s166 + $0xb8] sm:$0xff]
        %v220 = vld [vmem:[%s166 + $0xc0] sm:$0xff]
        %v221 = vld [vmem:[%s166 + $0xc8] sm:$0xff]
        %v222 = vld [vmem:[%s166 + $0xd0] sm:$0xff]
        %v223 = vld [vmem:[%s166 + $0xd8] sm:$0xff]
        %v224 = vld [vmem:[%s166 + $0xe0] sm:$0xff]
        %v225 = vld [vmem:[%s166 + $0xe8] sm:$0xff]
        %v226 = vld [vmem:[%s166 + $0xf0] sm:$0xff]
        %v227 = vld [vmem:[%s166 + $0xf8] sm:$0xff]
        %v228 = vld [vmem:[%s166 + $0x100] sm:$0xff]
        %v229 = vld [vmem:[%s166 + $0x108] sm:$0xff]
        %v230 = vld [vmem:[%s166 + $0x110] sm:$0xff]
        %v231 = vld [vmem:[%s166 + $0x118] sm:$0xff]
        %v232 = vld [vmem:[%s166 + $0x120] sm:$0x33]
        %v233 = vld [vmem:[%s166 + $0x128] sm:$0x33]
        %v234 = vld [vmem:[%s2] sm:$0xff]
        %v235 = vld [vmem:[%s2 + $0x8] sm:$0xff]
        %v236 = vld [vmem:[%s2 + $0x10] sm:$0xff]
        %v237 = vld [vmem:[%s2 + $0x18] sm:$0xff]
        %239 = vset.pattern.permute.xlu0 0
        %240 = vperm.xlu0 %239, %v234
        %v241 = vpop.permute.xlu0 %240
        %244 = vset.pattern.permute.xlu0 0
        %245 = vperm.xlu0 %244, %v235
        %v246 = vpop.permute.xlu0 %245
        %249 = vset.pattern.permute.xlu0 0
        %250 = vperm.xlu0 %249, %v236
        %v251 = vpop.permute.xlu0 %250
        %254 = vset.pattern.permute.xlu0 0
        %255 = vperm.xlu0 %254, %v237
        %v256 = vpop.permute.xlu0 %255
        %v262 = vunpack.c.l.b16 %v192
        %v263 = vunpack.c.h.b16 %v192
        %v264 = vunpack.c.l.b16 %v193
        %v265 = vunpack.c.h.b16 %v193
        %v266 = vunpack.c.l.b16 %v194
        %v267 = vunpack.c.h.b16 %v194
        %v268 = vunpack.c.l.b16 %v195
        %v269 = vunpack.c.h.b16 %v195
        %v270 = vpack.c.b16 %v264, %v262
        %v271 = vpack.c.b16 %v265, %v263
        %v272 = vpack.c.b16 %v268, %v266
        %v273 = vpack.c.b16 %v269, %v267
        %v314 = vunpack.c.l.b16 %v196
        %v315 = vunpack.c.h.b16 %v196
        %v316 = vunpack.c.l.b16 %v197
        %v317 = vunpack.c.h.b16 %v197
        %v318 = vunpack.c.l.b16 %v198
        %v319 = vunpack.c.h.b16 %v198
        %v320 = vunpack.c.l.b16 %v199
        %v321 = vunpack.c.h.b16 %v199
        %v322 = vunpack.c.l.b16 %v200
        %v323 = vunpack.c.h.b16 %v200
        %v324 = vunpack.c.l.b16 %v201
        %v325 = vunpack.c.h.b16 %v201
        %v326 = vunpack.c.l.b16 %v202
        %v327 = vunpack.c.h.b16 %v202
        %v328 = vunpack.c.l.b16 %v203
        %v329 = vunpack.c.h.b16 %v203
        %v330 = vunpack.c.l.b16 %v204
        %v331 = vunpack.c.h.b16 %v204
        %v332 = vunpack.c.l.b16 %v205
        %v333 = vunpack.c.h.b16 %v205
        %v334 = vunpack.c.l.b16 %v206
        %v335 = vunpack.c.h.b16 %v206
        %v336 = vunpack.c.l.b16 %v207
        %v337 = vunpack.c.h.b16 %v207
        %v338 = vunpack.c.l.b16 %v208
        %v339 = vunpack.c.h.b16 %v208
        %v340 = vunpack.c.l.b16 %v209
        %v341 = vunpack.c.h.b16 %v209
        %v342 = vunpack.c.l.b16 %v210
        %v343 = vunpack.c.h.b16 %v210
        %v344 = vunpack.c.l.b16 %v211
        %v345 = vunpack.c.h.b16 %v211
        %v346 = vunpack.c.l.b16 %v212
        %v347 = vunpack.c.h.b16 %v212
        %v348 = vunpack.c.l.b16 %v213
        %v349 = vunpack.c.h.b16 %v213
        %v350 = vunpack.c.l.b16 %v214
        %v351 = vunpack.c.h.b16 %v214
        %v352 = vunpack.c.l.b16 %v215
        %v353 = vunpack.c.h.b16 %v215
        %v354 = vunpack.c.l.b16 %v216
        %v355 = vunpack.c.h.b16 %v216
        %v356 = vunpack.c.l.b16 %v217
        %v357 = vunpack.c.h.b16 %v217
        %v358 = vunpack.c.l.b16 %v218
        %v359 = vunpack.c.h.b16 %v218
        %v360 = vunpack.c.l.b16 %v219
        %v361 = vunpack.c.h.b16 %v219
        %v362 = vunpack.c.l.b16 %v220
        %v363 = vunpack.c.h.b16 %v220
        %v364 = vunpack.c.l.b16 %v221
        %v365 = vunpack.c.h.b16 %v221
        %v366 = vunpack.c.l.b16 %v222
        %v367 = vunpack.c.h.b16 %v222
        %v368 = vunpack.c.l.b16 %v223
        %v369 = vunpack.c.h.b16 %v223
        %v370 = vunpack.c.l.b16 %v224
        %v371 = vunpack.c.h.b16 %v224
        %v372 = vunpack.c.l.b16 %v225
        %v373 = vunpack.c.h.b16 %v225
        %v374 = vunpack.c.l.b16 %v226
        %v375 = vunpack.c.h.b16 %v226
        %v376 = vunpack.c.l.b16 %v227
        %v377 = vunpack.c.h.b16 %v227
        %v378 = vunpack.c.l.b16 %v228
        %v379 = vunpack.c.h.b16 %v228
        %v380 = vunpack.c.l.b16 %v229
        %v381 = vunpack.c.h.b16 %v229
        %v382 = vunpack.c.l.b16 %v230
        %v383 = vunpack.c.h.b16 %v230
        %v384 = vunpack.c.l.b16 %v231
        %v385 = vunpack.c.h.b16 %v231
        %v386 = vunpack.c.l.b16 %v232
        %v387 = vunpack.c.h.b16 %v232
        %v388 = vunpack.c.l.b16 %v233
        %v389 = vunpack.c.h.b16 %v233
        %v390 = vpack.c.b16 %v318, %v314
        %v391 = vpack.c.b16 %v319, %v315
        %v392 = vpack.c.b16 %v320, %v316
        %v393 = vpack.c.b16 %v321, %v317
        %v394 = vpack.c.b16 %v326, %v322
        %v395 = vpack.c.b16 %v327, %v323
        %v396 = vpack.c.b16 %v328, %v324
        %v397 = vpack.c.b16 %v329, %v325
        %v398 = vpack.c.b16 %v334, %v330
        %v399 = vpack.c.b16 %v335, %v331
        %v400 = vpack.c.b16 %v336, %v332
        %v401 = vpack.c.b16 %v337, %v333
        %v402 = vpack.c.b16 %v342, %v338
        %v403 = vpack.c.b16 %v343, %v339
        %v404 = vpack.c.b16 %v344, %v340
        %v405 = vpack.c.b16 %v345, %v341
        %v406 = vpack.c.b16 %v350, %v346
        %v407 = vpack.c.b16 %v351, %v347
        %v408 = vpack.c.b16 %v352, %v348
        %v409 = vpack.c.b16 %v353, %v349
        %v410 = vpack.c.b16 %v358, %v354
        %v411 = vpack.c.b16 %v359, %v355
        %v412 = vpack.c.b16 %v360, %v356
        %v413 = vpack.c.b16 %v361, %v357
        %v414 = vpack.c.b16 %v366, %v362
        %v415 = vpack.c.b16 %v367, %v363
        %v416 = vpack.c.b16 %v368, %v364
        %v417 = vpack.c.b16 %v369, %v365
        %v418 = vpack.c.b16 %v374, %v370
        %v419 = vpack.c.b16 %v375, %v371
        %v420 = vpack.c.b16 %v376, %v372
        %v421 = vpack.c.b16 %v377, %v373
        %v422 = vpack.c.b16 %v382, %v378
        %v423 = vpack.c.b16 %v383, %v379
        %v424 = vpack.c.b16 %v384, %v380
        %v425 = vpack.c.b16 %v385, %v381
        %v426 = vpack.c.b16 %v386, %v386
        %v427 = vpack.c.b16 %v387, %v387
        %v428 = vpack.c.b16 %v388, %v388
        %v429 = vpack.c.b16 %v389, %v389
        %vm466 = vcmask 154624
        %v468 = vsel %vm466, %v271, 0
        %v471 = vsel %vm466, %v273, 0
        %vm473 = vcmask 1040384
        %vm474 = vcmask 1041408
        %v475 = vsel %vm473, 4294967295, 65535
        %v476 = vsel %vm474, %v475, 0
        %v478 = vand.u32 %v426, %v476
        %v481 = vand.u32 %v427, %v476
        %v484 = vand.u32 %v428, %v476
        %v487 = vand.u32 %v429, %v476
        %489 = vmatprep.subr.bf16.mxu0 %v391
        %490 = vmatpush1.bf16.msra.mxu0 %v390
        %491 = vmatprep.subr.bf16.mxu0 %v395
        %492 = vmatpush1.bf16.msra.mxu0 %v394
        %493 = vmatprep.subr.bf16.mxu0 %v399
        %494 = vmatpush1.bf16.msra.mxu0 %v398
        %495 = vmatprep.subr.bf16.mxu0 %v403
        %496 = vmatpush1.bf16.msra.mxu0 %v402
        %497 = vmatprep.subr.bf16.mxu0 %v407
        %498 = vmatpush1.bf16.msra.mxu0 %v406
        %499 = vmatprep.subr.bf16.mxu0 %v411
        %500 = vmatpush1.bf16.msra.mxu0 %v410
        %501 = vmatprep.subr.bf16.mxu0 %v415
        %502 = vmatpush1.bf16.msra.mxu0 %v414
        %503 = vmatprep.subr.bf16.mxu0 %v419
        %504 = vmatpush1.bf16.msra.mxu0 %v418
        %505 = vmatprep.subr.bf16.mxu0 %v423
        %506 = vmatpush1.bf16.msra.mxu0 %v422
        %507 = vmatprep.subr.bf16.mxu0 %v481
        %508 = vmatpush1.bf16.msra.mxu0 %v478
        %509 = vmatprep.subr.bf16.mxu0 0
        %510 = vmatpush1.bf16.msra.mxu0 0
        %511 = vmatprep.subr.bf16.mxu0 0
        %512 = vmatpush1.bf16.msra.mxu0 0
        %513 = vmatprep.subr.bf16.mxu0 0
        %514 = vmatpush1.bf16.msra.mxu0 0
        %515 = vmatprep.subr.bf16.mxu0 0
        %516 = vmatpush1.bf16.msra.mxu0 0
        %517 = vmatprep.subr.bf16.mxu0 0
        %518 = vmatpush1.bf16.msra.mxu0 0
        %519 = vmatprep.subr.bf16.mxu0 0
        %520 = vmatpush1.bf16.msra.mxu0 0
        %521 = vmatprep.mubr.bf16.mxu0 %v468
        %522 = vmatmul.mubr.bf16.gmra.mrb[0].mxu0 %v270
        %v523 = vpop.f32.mrb[0].mxu0
        %v524 = vadd.f32 %v241, %v523
        %v525 = vpop.f32.mrb[0].mxu0
        %v526 = vadd.f32 %v241, %v525
        %v527 = vpop.f32.mrb[0].mxu0
        %v528 = vadd.f32 %v246, %v527
        %v529 = vpop.f32.mrb[0].mxu0
        %v530 = vadd.f32 %v246, %v529
        %531 = vmatprep.mubr.bf16.mxu0 %v471
        %532 = vmatmul.mubr.bf16.gmra.mrb[0].mxu0 %v272
        %v533 = vpop.f32.mrb[0].mxu0
        %v534 = vadd.f32 %v251, %v533
        %v535 = vpop.f32.mrb[0].mxu0
        %v536 = vadd.f32 %v251, %v535
        %v537 = vpop.f32.mrb[0].mxu0
        %v538 = vadd.f32 %v256, %v537
        %v539 = vpop.f32.mrb[0].mxu0
        %v540 = vadd.f32 %v256, %v539
        %541 = vdwg.mxu0
        %542 = vmatprep.subr.bf16.mxu0 %v393
        %543 = vmatpush1.bf16.msra.mxu0 %v392
        %544 = vmatprep.subr.bf16.mxu0 %v397
        %545 = vmatpush1.bf16.msra.mxu0 %v396
        %546 = vmatprep.subr.bf16.mxu0 %v401
        %547 = vmatpush1.bf16.msra.mxu0 %v400
        %548 = vmatprep.subr.bf16.mxu0 %v405
        %549 = vmatpush1.bf16.msra.mxu0 %v404
        %550 = vmatprep.subr.bf16.mxu0 %v409
        %551 = vmatpush1.bf16.msra.mxu0 %v408
        %552 = vmatprep.subr.bf16.mxu0 %v413
        %553 = vmatpush1.bf16.msra.mxu0 %v412
        %554 = vmatprep.subr.bf16.mxu0 %v417
        %555 = vmatpush1.bf16.msra.mxu0 %v416
        %556 = vmatprep.subr.bf16.mxu0 %v421
        %557 = vmatpush1.bf16.msra.mxu0 %v420
        %558 = vmatprep.subr.bf16.mxu0 %v425
        %559 = vmatpush1.bf16.msra.mxu0 %v424
        %560 = vmatprep.subr.bf16.mxu0 %v487
        %561 = vmatpush1.bf16.msra.mxu0 %v484
        %562 = vmatprep.subr.bf16.mxu0 0
        %563 = vmatpush1.bf16.msra.mxu0 0
        %564 = vmatprep.subr.bf16.mxu0 0
        %565 = vmatpush1.bf16.msra.mxu0 0
        %566 = vmatprep.subr.bf16.mxu0 0
        %567 = vmatpush1.bf16.msra.mxu0 0
        %568 = vmatprep.subr.bf16.mxu0 0
        %569 = vmatpush1.bf16.msra.mxu0 0
        %570 = vmatprep.subr.bf16.mxu0 0
        %571 = vmatpush1.bf16.msra.mxu0 0
        %572 = vmatprep.subr.bf16.mxu0 0
        %573 = vmatpush1.bf16.msra.mxu0 0
        %574 = vmatprep.mubr.bf16.mxu0 %v468
        %575 = vmatmul.mubr.bf16.gmra.mrb[0].mxu0 %v270
        %v576 = vpop.f32.mrb[0].mxu0
        %v577 = vadd.f32 %v241, %v576
        %v578 = vpop.f32.mrb[0].mxu0
        %v579 = vadd.f32 %v241, %v578
        %v580 = vpop.f32.mrb[0].mxu0
        %v581 = vadd.f32 %v246, %v580
        %v582 = vpop.f32.mrb[0].mxu0
        %v583 = vadd.f32 %v246, %v582
        %584 = vmatprep.mubr.bf16.mxu0 %v471
        %585 = vmatmul.mubr.bf16.gmra.mrb[0].mxu0 %v272
        %v586 = vpop.f32.mrb[0].mxu0
        %v587 = vadd.f32 %v251, %v586
        %v588 = vpop.f32.mrb[0].mxu0
        %v589 = vadd.f32 %v251, %v588
        %v590 = vpop.f32.mrb[0].mxu0
        %v591 = vadd.f32 %v256, %v590
        %v592 = vpop.f32.mrb[0].mxu0
        %v593 = vadd.f32 %v256, %v592
        %594 = vdwg.mxu0
        %v595 = vxor.u32 %v524, 2147483648
        %v596 = vxor.u32 %v526, 2147483648
        %v597 = vxor.u32 %v577, 2147483648
        %v598 = vxor.u32 %v579, 2147483648
        %v599 = vxor.u32 %v528, 2147483648
        %v600 = vxor.u32 %v530, 2147483648
        %v601 = vxor.u32 %v581, 2147483648
        %v602 = vxor.u32 %v583, 2147483648
        %v603 = vxor.u32 %v534, 2147483648
        %v604 = vxor.u32 %v536, 2147483648
        %v605 = vxor.u32 %v587, 2147483648
        %v606 = vxor.u32 %v589, 2147483648
        %v607 = vxor.u32 %v538, 2147483648
        %v608 = vxor.u32 %v540, 2147483648
        %v609 = vxor.u32 %v591, 2147483648
        %v610 = vxor.u32 %v593, 2147483648
        %v611 = vmul.f32 %v595, 1.442695
        %v612 = vpow.pop %v611
        %v613 = vmul.f32 %v596, 1.442695
        %v614 = vpow.pop %v613
        %v615 = vmul.f32 %v597, 1.442695
        %v616 = vpow.pop %v615
        %v617 = vmul.f32 %v598, 1.442695
        %v618 = vpow.pop %v617
        %v619 = vmul.f32 %v599, 1.442695
        %v620 = vpow.pop %v619
        %v621 = vmul.f32 %v600, 1.442695
        %v622 = vpow.pop %v621
        %v623 = vmul.f32 %v601, 1.442695
        %v624 = vpow.pop %v623
        %v625 = vmul.f32 %v602, 1.442695
        %v626 = vpow.pop %v625
        %v627 = vmul.f32 %v603, 1.442695
        %v628 = vpow.pop %v627
        %v629 = vmul.f32 %v604, 1.442695
        %v630 = vpow.pop %v629
        %v631 = vmul.f32 %v605, 1.442695
        %v632 = vpow.pop %v631
        %v633 = vmul.f32 %v606, 1.442695
        %v634 = vpow.pop %v633
        %v635 = vmul.f32 %v607, 1.442695
        %v636 = vpow.pop %v635
        %v637 = vmul.f32 %v608, 1.442695
        %v638 = vpow.pop %v637
        %v639 = vmul.f32 %v609, 1.442695
        %v640 = vpow.pop %v639
        %v641 = vmul.f32 %v610, 1.442695
        %v642 = vpow.pop %v641
        %v643 = vadd.f32 %v612, 1.0
        %v644 = vadd.f32 %v614, 1.0
        %v645 = vadd.f32 %v616, 1.0
        %v646 = vadd.f32 %v618, 1.0
        %v647 = vadd.f32 %v620, 1.0
        %v648 = vadd.f32 %v622, 1.0
        %v649 = vadd.f32 %v624, 1.0
        %v650 = vadd.f32 %v626, 1.0
        %v651 = vadd.f32 %v628, 1.0
        %v652 = vadd.f32 %v630, 1.0
        %v653 = vadd.f32 %v632, 1.0
        %v654 = vadd.f32 %v634, 1.0
        %v655 = vadd.f32 %v636, 1.0
        %v656 = vadd.f32 %v638, 1.0
        %v657 = vadd.f32 %v640, 1.0
        %v658 = vadd.f32 %v642, 1.0
        %v659 = vrcp.pop %v643
        %v660 = vmul.f32 1.0, %v659
        %v661 = vrcp.pop %v644
        %v662 = vmul.f32 1.0, %v661
        %v663 = vrcp.pop %v645
        %v664 = vmul.f32 1.0, %v663
        %v665 = vrcp.pop %v646
        %v666 = vmul.f32 1.0, %v665
        %v667 = vrcp.pop %v647
        %v668 = vmul.f32 1.0, %v667
        %v669 = vrcp.pop %v648
        %v670 = vmul.f32 1.0, %v669
        %v671 = vrcp.pop %v649
        %v672 = vmul.f32 1.0, %v671
        %v673 = vrcp.pop %v650
        %v674 = vmul.f32 1.0, %v673
        %v675 = vrcp.pop %v651
        %v676 = vmul.f32 1.0, %v675
        %v677 = vrcp.pop %v652
        %v678 = vmul.f32 1.0, %v677
        %v679 = vrcp.pop %v653
        %v680 = vmul.f32 1.0, %v679
        %v681 = vrcp.pop %v654
        %v682 = vmul.f32 1.0, %v681
        %v683 = vrcp.pop %v655
        %v684 = vmul.f32 1.0, %v683
        %v685 = vrcp.pop %v656
        %v686 = vmul.f32 1.0, %v685
        %v687 = vrcp.pop %v657
        %v688 = vmul.f32 1.0, %v687
        %v689 = vrcp.pop %v658
        %v690 = vmul.f32 1.0, %v689
        %v691 = vmul.f32 %v524, %v660
        %v692 = vmul.f32 %v526, %v662
        %v693 = vmul.f32 %v577, %v664
        %v694 = vmul.f32 %v579, %v666
        %v695 = vmul.f32 %v528, %v668
        %v696 = vmul.f32 %v530, %v670
        %v697 = vmul.f32 %v581, %v672
        %v698 = vmul.f32 %v583, %v674
        %v699 = vmul.f32 %v534, %v676
        %v700 = vmul.f32 %v536, %v678
        %v701 = vmul.f32 %v587, %v680
        %v702 = vmul.f32 %v589, %v682
        %v703 = vmul.f32 %v538, %v684
        %v704 = vmul.f32 %v540, %v686
        %v705 = vmul.f32 %v591, %v688
        %v706 = vmul.f32 %v593, %v690
        %v707 = vpack.c.bf16 %v695, %v691
        %v708 = vpack.c.bf16 %v696, %v692
        %v709 = vpack.c.bf16 %v697, %v693
        %v710 = vpack.c.bf16 %v698, %v694
        %v711 = vpack.c.bf16 %v703, %v699
        %v712 = vpack.c.bf16 %v704, %v700
        %v713 = vpack.c.bf16 %v705, %v701
        %v714 = vpack.c.bf16 %v706, %v702
        %v723 = vunpack.c.l.b16 %v707
        %v724 = vunpack.c.l.b16 %v708
        %v725 = vunpack.c.l.b16 %v709
        %v726 = vunpack.c.l.b16 %v710
        %v727 = vunpack.c.h.b16 %v707
        %v728 = vunpack.c.h.b16 %v708
        %v729 = vunpack.c.h.b16 %v709
        %v730 = vunpack.c.h.b16 %v710
        %v731 = vunpack.c.l.b16 %v711
        %v732 = vunpack.c.l.b16 %v712
        %v733 = vunpack.c.l.b16 %v713
        %v734 = vunpack.c.l.b16 %v714
        %v735 = vunpack.c.h.b16 %v711
        %v736 = vunpack.c.h.b16 %v712
        %v737 = vunpack.c.h.b16 %v713
        %v738 = vunpack.c.h.b16 %v714
        %v739 = vpack.c.b16 %v724, %v723
        %v740 = vpack.c.b16 %v726, %v725
        %v741 = vpack.c.b16 %v728, %v727
        %v742 = vpack.c.b16 %v730, %v729
        %v743 = vpack.c.b16 %v732, %v731
        %v744 = vpack.c.b16 %v734, %v733
        %v745 = vpack.c.b16 %v736, %v735
        %v746 = vpack.c.b16 %v738, %v737
        %755 = vst [vmem:[%s188] sm:$0xff] %v739
        %756 = vst [vmem:[%s188 + $0x8] sm:$0xff] %v740
        %757 = vst [vmem:[%s188 + $0x10] sm:$0xff] %v741
        %758 = vst [vmem:[%s188 + $0x18] sm:$0xff] %v742
        %759 = vst [vmem:[%s188 + $0x20] sm:$0xff] %v743
        %760 = vst [vmem:[%s188 + $0x28] sm:$0xff] %v744
        %761 = vst [vmem:[%s188 + $0x30] sm:$0xff] %v745
        %762 = vst [vmem:[%s188 + $0x38] sm:$0xff] %v746
        %s763 = sand.u32 %s96, 1
        %s764 = scalar_lea.sflag [#allocation4], %s763
        %s765 = sand.u32 %s96, 1
        %s766 = smul.addr %s765, 64
        %s767 = scalar_lea.vmem [#allocation5], %s766
        // Predicated region
        $region37: #{tpu_custom_call.1} parent=31 // pred_check
          %p768 = pneg %p106
        $region38: #{tpu_custom_call.1} parent=31 // pred_check_branch
          %770 = sbr.rel (%p768) target = $region40
        $region39: #{tpu_custom_call.1} parent=31 // pred_region
          %s771 = smul.u32 4, %s20
          %s773 = ssub.s32 1024, 1024
          %774 = vsyncadd %s764, %s773
          %s775 = smul.addr %s771, 64
          %s776 = scalar_lea.hbm %s3, %s775
          %s777 = sshll.u32 %s767, 4
          %s778 = int_to_ptr.vmem [resolvable:$true] %s777
          %783 = dma.vmem_to_hbm [thread:$0]  %s778, 1024, %s776, %s764, 256, 1024, 16
        $region40: #{tpu_custom_call.1} parent=31 // pred_fallthru
          _
      $region32: #{tpu_custom_call.1} parent=5 // pred_fallthru
        _
      %p784 = scmp.le.s32.totalorder 2, %s15
      // Predicated region
      $region41: #{tpu_custom_call.1} parent=5 // pred_check
        %p785 = pneg %p784
      $region42: #{tpu_custom_call.1} parent=5 // pred_check_branch
        %787 = sbr.rel (%p785) target = $region44
      $region43: #{tpu_custom_call.1} parent=5 // pred_region
        %s788 = ssub.s32 %s15, 2
        // Predicated region
        $region45: #{tpu_custom_call.1} parent=43 // pred_check
          %p789 = pneg %p112
        $region46: #{tpu_custom_call.1} parent=43 // pred_check_branch
          %791 = sbr.rel (%p789) target = $region48
        $region47: #{tpu_custom_call.1} parent=43 // pred_region
          %s792 = sand.u32 %s97, 1
          %s793 = scalar_lea.sflag [#allocation4], %s792
          %s794 = sand.u32 %s97, 1
          %s795 = smul.addr %s794, 64
          %s796 = scalar_lea.vmem [#allocation5], %s795
          %797 = dma.done %s793, 1024
        $region48: #{tpu_custom_call.1} parent=43 // pred_fallthru
          _
      $region44: #{tpu_custom_call.1} parent=5 // pred_fallthru
        _
    $region6: #{tpu_custom_call.1} parent=1 // loop_footer
      %s19 = sadd.s32 1, %s15
    $region7: #{tpu_custom_call.1} parent=1 // loop_footer_branch
      %14 = sbr.rel target = $region3
    $region8: #{tpu_custom_call.1} parent=1 // loop_exit
      _
    %798 = vsyncpa [#allocation3], 1
    %s799 = scalar_lea.sflag [#allocation3], 1
    %800 = vsyncpa %s799, 1
    %801 = vsyncpa [#allocation4], 1
    %s802 = scalar_lea.sflag [#allocation4], 1
    %803 = vsyncpa %s802, 1

</llo_original>
